<compile_context>
chip_gen: v5e
topology: v5e:2x2
jax: 0.10.0
libtpu: 0.0.40
codegen_flags: <defaults>
</compile_context>

<pallas_src>
import functools

import jax
import jax.numpy as jnp
from jax import lax
from jax.experimental import pallas as pl
from jax.experimental.pallas import tpu as pltpu

KS = 7          # spatial-attention kernel size (CBAM default 7)
PAD = 3         # padding for kernel_size == 7


def _round_up(a, b):
    return (a + b - 1) // b * b


_ROLL_SIGN = {}


def _roll_sign():
    """Sign s such that pltpu.roll(x, (s*d) % n, -1)[p] == x[(p + d) % n]."""
    if "s" not in _ROLL_SIGN:
        def probe(x_ref, o_ref):
            o_ref[...] = pltpu.roll(x_ref[...], 1, 1)

        x = jnp.broadcast_to(
            jnp.arange(256, dtype=jnp.float32)[None, :], (8, 256))
        with jax.ensure_compile_time_eval():
            y = pl.pallas_call(
                probe,
                out_shape=jax.ShapeDtypeStruct((8, 256), jnp.float32),
            )(x)
        # jnp.roll semantics (result[i] = x[i - shift]) => y[0, 1] == x[0, 0] == 0
        _ROLL_SIGN["s"] = -1 if float(y[0, 1]) == 0.0 else 1
    return _ROLL_SIGN["s"]


def _cbam_kernel(x_ref, wfc_ref, bfc_ref, col_ref, wsp_ref, out_ref,
                 pm_ref, px_ref, *, W, HW, HWp, margin, use_mxu, roll_sign):
    nb, C, _ = x_ref.shape
    flat_len = pm_ref.shape[1]

    x_t = x_ref[...].astype(jnp.float32)                           # (nb,C,HWp)

    # ---- channel attention: global avg-pool + 1x1 conv (FC) + sigmoid ------
    # (sum over the padded lane axis is exact: pad columns are zero; divide
    #  by the true H*W)
    pooled = jnp.sum(x_t, axis=-1) * (1.0 / float(HW))             # (nb, C)
    if use_mxu:
        y = jnp.dot(pooled, wfc_ref[...],
                    preferred_element_type=jnp.float32) + bfc_ref[...]
    else:
        # tiny C: a VPU broadcast-sum beats padding the MXU
        y = jnp.sum(pooled[:, :, None] * wfc_ref[...][None, :, :],
                    axis=1) + bfc_ref[...]
    x1 = x_t * jax.nn.sigmoid(y)[:, :, None]                       # (nb,C,HWp)

    # ---- spatial attention --------------------------------------------------
    mean_c = jnp.mean(x1, axis=1)                                  # (nb, HWp)
    max_c = jnp.max(x1, axis=1)                                    # (nb, HWp)

    # Zero only the margins (interior is fully overwritten every step).
    zmargin = jnp.zeros((nb, margin), jnp.float32)
    pm_ref[:, 0:margin] = zmargin
    px_ref[:, 0:margin] = zmargin
    pm_ref[:, margin + HWp:flat_len] = zmargin
    px_ref[:, margin + HWp:flat_len] = zmargin
    pm_ref[:, margin:margin + HWp] = mean_c
    px_ref[:, margin:margin + HWp] = max_c

    # One row-shifted window load per ky per map; reused across all kx taps.
    rows_m, rows_x = [], []
    for ky in range(KS):
        start = margin + (ky - PAD) * W
        if ky == PAD:
            rows_m.append(mean_c)
            rows_x.append(max_c)
        else:
            rows_m.append(pm_ref[:, start:start + HWp])
            rows_x.append(px_ref[:, start:start + HWp])

    col = col_ref[...]                                             # (1, HWp)
    acc = jnp.zeros((nb, HWp), jnp.float32)
    for kx in range(KS):
        # ky-combined partial sum for this kx column of taps (mean+max merged)
        s = None
        for ky in range(KS):
            t = ky * KS + kx
            term = rows_m[ky] * wsp_ref[0, t] + rows_x[ky] * wsp_ref[1, t]
            s = term if s is None else s + term
        d = kx - PAD
        if d != 0:
            # cyclic lane shift; wrapped / cross-row lanes are masked below
            s = pltpu.roll(s, (roll_sign * d) % HWp, 1)
            if d < 0:        # left taps: need col + d >= 0
                s = jnp.where(col >= float(-d), s, 0.0)
            else:            # right taps: need col + d < W
                s = jnp.where(col < float(W - d), s, 0.0)
        acc = acc + s
    sa = jax.nn.sigmoid(acc)                                       # (nb, HWp)

    out_ref[...] = (x1 * sa[:, None, :]).astype(out_ref.dtype)


def cbam_forward(x, w_fc, b_fc, w_sp, *, target_block_bytes=2 << 20):
    """x: (N, C, H, W); w_fc: (C, C) [out,in]; b_fc: (C,); w_sp: (2, KS, KS)."""
    N, C, H, W = x.shape
    HW = H * W
    HWp = _round_up(HW, 128)                       # lane-dense output stores

    x_flat = x.reshape(N, C, HW)
    if HWp != HW:
        x_flat = jnp.pad(x_flat, ((0, 0), (0, 0), (0, HWp - HW)))

    # Batch block: ~target_block_bytes per block; cap so there are >= 2 grid
    # steps (dual TensorCore on v7x); pad N instead of requiring N % nb == 0.
    bytes_per_img = C * HWp * x.dtype.itemsize
    nb = max(1, min(N, target_block_bytes // max(1, bytes_per_img)))
    if N >= 2:
        nb = min(nb, max(1, (N + 1) // 2))
    grid_n = int(pl.cdiv(N, nb))
    N_pad = grid_n * nb
    if N_pad != N:
        x_flat = jnp.pad(x_flat, ((0, N_pad - N), (0, 0), (0, 0)))

    # zero margin around the flattened spatial maps (only row shifts of up to
    # +-3W land in the margins now; kx shifts are in-register rolls)
    margin = _round_up(PAD * W, 128)
    flat_len = HWp + 2 * margin

    w_fc_t = jnp.asarray(w_fc, jnp.float32).T                # (C, C): [in,out]
    b_fc2 = jnp.asarray(b_fc, jnp.float32).reshape(1, C)
    wsp_flat = jnp.asarray(w_sp, jnp.float32).reshape(2, KS * KS)  # SMEM taps
    col_idx = (jnp.arange(HWp, dtype=jnp.int32) % W).astype(jnp.float32)
    col_idx = col_idx.reshape(1, HWp)

    kernel = functools.partial(
        _cbam_kernel, W=W, HW=HW, HWp=HWp, margin=margin,
        use_mxu=(C >= 128), roll_sign=_roll_sign())

    block_bytes = nb * C * HWp * x.dtype.itemsize
    vmem_est = (4 * block_bytes                    # in + out, double-buffered
                + 2 * nb * C * HWp * 4             # x_t, x1 (f32)
                + 20 * nb * HWp * 4                # maps / rows / accumulators
                + 2 * nb * flat_len * 4            # pm / px scratch
                + (4 << 20))                       # slack
    vmem_limit = int(min(max(vmem_est, 32 << 20), 64 << 20))

    out_flat = pl.pallas_call(
        kernel,
        out_shape=jax.ShapeDtypeStruct((N_pad, C, HWp), x.dtype),
        grid=(grid_n,),
        in_specs=[
            pl.BlockSpec((nb, C, HWp), lambda b: (b, 0, 0)),        # x
            pl.BlockSpec((C, C), lambda b: (0, 0)),                 # w_fc^T
            pl.BlockSpec((1, C), lambda b: (0, 0)),                 # b_fc
            pl.BlockSpec((1, HWp), lambda b: (0, 0)),               # col index
            pl.BlockSpec(memory_space=pltpu.MemorySpace.SMEM),      # tap wts
        ],
        out_specs=pl.BlockSpec((nb, C, HWp), lambda b: (b, 0, 0)),
        scratch_shapes=[
            pltpu.VMEM((nb, flat_len), jnp.float32),                # mean row
            pltpu.VMEM((nb, flat_len), jnp.float32),                # max row
        ],
        compiler_params=pltpu.CompilerParams(
            dimension_semantics=("parallel",),
            vmem_limit_bytes=vmem_limit,
        ),
    )(x_flat, w_fc_t, b_fc2, col_idx, wsp_flat)

    return out_flat[:N, :, :HW].reshape(N, C, H, W)


def cbam_reference(x, w_fc, b_fc, w_sp):
    """Pure-JAX reference matching the PyTorch CBAM forward."""
    N, C, H, W = x.shape
    # ChannelAttention
    avg = jnp.mean(x, axis=(2, 3), keepdims=True)                   # (N,C,1,1)
    y = jnp.einsum('ok,nkij->noij', w_fc, avg) + b_fc.reshape(1, C, 1, 1)
    x1 = x * jax.nn.sigmoid(y)
    # SpatialAttention
    mean_c = jnp.mean(x1, axis=1, keepdims=True)
    max_c = jnp.max(x1, axis=1, keepdims=True)
    inp = jnp.concatenate([mean_c, max_c], axis=1)                  # (N,2,H,W)
    conv = lax.conv_general_dilated(
        inp, w_sp.reshape(1, 2, KS, KS), window_strides=(1, 1),
        padding=((PAD, PAD), (PAD, PAD)),
        dimension_numbers=('NCHW', 'OIHW', 'NCHW'))
    return x1 * jax.nn.sigmoid(conv)


if __name__ == "__main__":
    N, C, H, W = 2, 4, 16, 16

    key = jax.random.PRNGKey(0)
    kx_, k1, k2, k3 = jax.random.split(key, 4)

    x = jax.random.normal(kx_, (N, C, H, W), jnp.float32)
    # Synthetic parameters with the module's shapes:
    #   ChannelAttention.fc : Conv2d(C, C, 1, bias=True) -> (C, C) weight, (C,) bias
    #   SpatialAttention.cv1: Conv2d(2, 1, 7, pad=3, bias=False) -> (2, 7, 7) weight
    w_fc = jax.random.normal(k1, (C, C), jnp.float32) * 0.3
    b_fc = jax.random.normal(k2, (C,), jnp.float32) * 0.1
    w_sp = jax.random.normal(k3, (2, KS, KS), jnp.float32) * 0.1

    out = jax.block_until_ready(cbam_forward(x, w_fc, b_fc, w_sp))
    ref = jax.block_until_ready(cbam_reference(x, w_fc, b_fc, w_sp))

    assert out.shape == ref.shape and out.dtype == ref.dtype
    err = float(jnp.max(jnp.abs(out - ref)))
    assert jnp.allclose(out, ref, atol=1e-4, rtol=1e-4), f"max abs err {err}"

    print("KERNEL_OK")
</pallas_src>

<mosaic_0001>
module attributes {stable_mosaic.version = 11 : i64} {
  func.func @probe(%arg0: memref<8x256xf32, #tpu.memory_space<vmem>>, %arg1: memref<8x256xf32, #tpu.memory_space<vmem>>) attributes {dimension_semantics = [], scalar_prefetch = 0 : i64, scratch_operands = 0 : i64, tpu.core_type = #tpu.core_type<tc>} {
    %c0 = arith.constant 0 : index
    %c0_0 = arith.constant 0 : index
    %0 = vector.load %arg0[%c0, %c0_0] : memref<8x256xf32, #tpu.memory_space<vmem>>, vector<8x256xf32>
    %c1_i32 = arith.constant 1 : i32
    %1 = tpu.dynamic_rotate %0 by %c1_i32 dim 1 : vector<8x256xf32>, i32 -> vector<8x256xf32>
    %c0_1 = arith.constant 0 : index
    %c0_2 = arith.constant 0 : index
    %2 = vector.load %arg1[%c0_1, %c0_2] : memref<8x256xf32, #tpu.memory_space<vmem>>, vector<8x256xf32>
    tpu.vector_store %arg1[%c0_1, %c0_2], %1 {strides = array<i32>} : memref<8x256xf32, #tpu.memory_space<vmem>>, vector<8x256xf32>,
    return
  }
}

</mosaic_0001>

<llo_original>
// kernel: tpu_custom_call.1
$region0: #{tpu_custom_call.1}
  #allocation0 [shape = 'u32[]', space=smem, size = 0x4, offset = 0x4, fixed_abs, tag = 'smem constant byte address 0x4 - core index']
  #allocation1 [shape = 'u32[72,128]{1,0:T(1,128)}', space=vmem, size = 0x9000, scoped, tag = 'internal scratch']
  %s0 = inlined_call_operand.hbm [shape: f32[8,256], index: 0, kind: input, shape index: {}]
  %s1 = inlined_call_operand.hbm [shape: f32[8,256], index: 1, kind: output, shape index: {}]
  %s2 = sld [smem:[#allocation0]]
  $region18: #{tpu_custom_call.1} parent=0
    _
  %s4 = ssub.s32 1, %s2
  %s5 = scalar_select 0, %s4, %s2
  $region1: #{tpu_custom_call.1} parent=0
    #allocation2 [shape = 'u8[8192]{0}', space=vmem, size = 0x2000, scoped, tag = 'input window, operand 0, single buffered']
    #allocation3 [shape = 's32[1]{0}', space=sflag, size = 0x4, scoped, tag = 'scoped memory for tpu_custom_call.1']
    #allocation4 [shape = 's32[1]{0}', space=sflag, size = 0x4, scoped, tag = 'scoped memory for tpu_custom_call.1']
    #allocation5 [shape = 'u8[8192]{0}', space=vmem, size = 0x2000, scoped, tag = 'output window, operand 0, single buffered']
    %6 = vsyncpa [#allocation3], 0
    %7 = vsyncpa [#allocation4], 0
    // Predicated region
    $region2: #{tpu_custom_call.1} parent=1 // pred_check
      _
    $region3: #{tpu_custom_call.1} parent=1 // pred_check_branch
      %9 = sbr.rel (0) target = $region5
    $region4: #{tpu_custom_call.1} parent=1 // pred_region
      %11 = vsyncadd [#allocation3], 0
      %s13 = sshll.u32 %s0, 4
      %s14 = int_to_ptr.hbm [resolvable:$true] %s13
      %s15 = sshll.u32 [#allocation2], 4
      %s16 = int_to_ptr.vmem [resolvable:$true] %s15
      %18 = dma.hbm_to_vmem [thread:$0]  %s14, 256, %s16, [#allocation3]
    $region5: #{tpu_custom_call.1} parent=1 // pred_fallthru
      _
    // Predicated region
    $region6: #{tpu_custom_call.1} parent=1 // pred_check
      _
    $region7: #{tpu_custom_call.1} parent=1 // pred_check_branch
      %20 = sbr.rel (0) target = $region9
    $region8: #{tpu_custom_call.1} parent=1 // pred_region
      %22 = dma.done [#allocation3], 256
    $region9: #{tpu_custom_call.1} parent=1 // pred_fallthru
      _
    %v23 = vld [vmem:[#allocation2] sm:$0xff]
    %v24 = vld [vmem:[#allocation2 + $0x8] sm:$0xff]
    %25 = vrot.lane.b32.xlu0 %v23, 1
    %v26 = vpop.permute.xlu0 %25
    %27 = vrot.lane.b32.xlu0 %v24, 1
    %v28 = vpop.permute.xlu0 %27
    %v29 = vlaneseq
    %v30 = vand.u32 %v29, 127
    %vm31 = vcmp.lt.s32.totalorder %v30, 1
    %v32 = vsel %vm31, %v26, %v28
    %v33 = vsel %vm31, %v28, %v26
    %34 = vst [vmem:[#allocation5] sm:$0xff] %v33
    %35 = vst [vmem:[#allocation5 + $0x8] sm:$0xff] %v32
    // Predicated region
    $region10: #{tpu_custom_call.1} parent=1 // pred_check
      _
    $region11: #{tpu_custom_call.1} parent=1 // pred_check_branch
      %37 = sbr.rel (0) target = $region13
    $region12: #{tpu_custom_call.1} parent=1 // pred_region
      %39 = vsyncadd [#allocation4], 0
      %s41 = sshll.u32 [#allocation5], 4
      %s42 = int_to_ptr.vmem [resolvable:$true] %s41
      %s43 = sshll.u32 %s1, 4
      %s44 = int_to_ptr.hbm [resolvable:$true] %s43
      %46 = dma.vmem_to_hbm [thread:$0]  %s42, 256, %s44, [#allocation4]
    $region13: #{tpu_custom_call.1} parent=1 // pred_fallthru
      _
    // Predicated region
    $region14: #{tpu_custom_call.1} parent=1 // pred_check
      _
    $region15: #{tpu_custom_call.1} parent=1 // pred_check_branch
      %48 = sbr.rel (0) target = $region17
    $region16: #{tpu_custom_call.1} parent=1 // pred_region
      %50 = dma.done [#allocation4], 256
    $region17: #{tpu_custom_call.1} parent=1 // pred_fallthru
      _
    %51 = vsyncpa [#allocation3], 1
    %52 = vsyncpa [#allocation4], 1

</llo_original>
